<compile_context>
chip_gen: v7x
topology: tpu7x:2x2x1
jax: 0.10.0
libtpu: 0.0.40
codegen_flags: <defaults>
</compile_context>

<pallas_src>
import jax
import jax.numpy as jnp
from jax.experimental import pallas as pl
from jax.experimental.pallas import tpu as pltpu


_VMEM_LIMIT_BYTES = 32 * 1024 * 1024  # explicit scoped-VMEM cap (safe on v5e/v6e/v7x)


def _dynamics_kernel(s_ref, n_ref, ws_ref, wn_ref, o_ref):
    """One batch tile: fused concat + folded change-of-basis round trip.

    s_ref:  (bt, D)              t = 0 states
    n_ref:  (bt, horizon*D)      t >= 1 states, time packed into lanes
    ws_ref: (D, time*D)          folded weight routing t=0 into lanes [0, D)
    wn_ref: (horizon*D, time*D)  block-diagonal folded weight for t >= 1 slots
    o_ref:  (bt, time*D)         predicted trajectory, time packed into lanes
    """
    acc = jnp.dot(s_ref[...], ws_ref[...], preferred_element_type=jnp.float32)
    acc = acc + jnp.dot(n_ref[...], wn_ref[...], preferred_element_type=jnp.float32)
    o_ref[...] = acc.astype(o_ref.dtype)  # single lane-dense, 128-aligned store


def _round_up(x, m):
    return (x + m - 1) // m * m


def _choose_batch_tile(batch, padded_row_bytes, weight_bytes):
    """Batch rows per grid step.

    Uses lane-PADDED per-row bytes (each pipelined VMEM buffer rounds its last dim up
    to a multiple of 128 lanes) and reserves room for the double-buffered grid-invariant
    weight blocks — fixing the ~4x undercount flagged in the review.
    """
    budget = _VMEM_LIMIT_BYTES // 2 - 2 * weight_bytes  # pipeline working set + headroom
    budget = max(budget, 2 * 1024 * 1024)
    per_row = 2 * padded_row_bytes                      # x2: double-buffered in/out blocks
    cap = max(8, (budget // max(per_row, 1)) // 8 * 8)
    # Keep >= ~4 grid steps when the batch allows it: "parallel" needs >= 2 steps to
    # shard across TensorCores (v7x megacore), and pipelining needs >= 2 to overlap.
    target = max(8, _round_up(pl.cdiv(batch, 4), 8))
    tile = min(cap, target)
    return batch if tile >= batch else tile


def markov_dynamics_forward(state, next_state, change_of_basis, inv_change_of_basis):
    """Pallas implementation of MarkovDynamics.forward().

    Args:
        state:               (batch, state_dim)
        next_state:          (batch, pred_horizon, state_dim) or (batch, state_dim)
        change_of_basis:     (state_dim, state_dim)
        inv_change_of_basis: (state_dim, state_dim)

    Returns:
        dict with 'pred_state_traj': (batch, pred_horizon + 1, state_dim)
    """
    if next_state.ndim == 2:  # pred_horizon == 1 convenience form from the docstring
        next_state = next_state[:, None, :]
    batch, D = state.shape
    horizon = next_state.shape[1]
    time = horizon + 1
    dtype = state.dtype

    # Folded basis round trip: (x @ C^T) @ Cinv^T == x @ (C^T @ Cinv^T) = x @ W.
    w_fold = (change_of_basis.T @ inv_change_of_basis.T).astype(dtype)

    # Lane-packing weights (built once; tiny DxD-scale work, constant-folded under jit):
    #   Ws routes the t=0 state into output lanes [0, D).
    #   Wn = [0 | kron(I_horizon, W)] routes next_state[t] into lanes [(t+1)*D, (t+2)*D).
    w_state = jnp.zeros((D, time * D), dtype).at[:, :D].set(w_fold)
    w_next = jnp.concatenate(
        [jnp.zeros((horizon * D, D), dtype),
         jnp.kron(jnp.eye(horizon, dtype=dtype), w_fold)],
        axis=1,
    )

    # Free, contiguous reshape: time packed into lanes for the t>=1 stream.
    next_packed = next_state.reshape(batch, horizon * D)

    itemsize = jnp.dtype(dtype).itemsize
    padded_row_bytes = itemsize * (
        _round_up(D, 128) + _round_up(horizon * D, 128) + _round_up(time * D, 128)
    )
    weight_bytes = itemsize * _round_up(time * D, 128) * (
        _round_up(D, 8) + _round_up(horizon * D, 8)
    )
    bt = _choose_batch_tile(batch, padded_row_bytes, weight_bytes)
    grid = (pl.cdiv(batch, bt),)

    flat_pred = pl.pallas_call(
        _dynamics_kernel,
        out_shape=jax.ShapeDtypeStruct((batch, time * D), dtype),
        grid=grid,
        in_specs=[
            pl.BlockSpec((bt, D), lambda i: (i, 0)),            # state rows, pipelined
            pl.BlockSpec((bt, horizon * D), lambda i: (i, 0)),  # packed next rows
            pl.BlockSpec((D, time * D), lambda i: (0, 0)),      # Ws (fetched once)
            pl.BlockSpec((horizon * D, time * D), lambda i: (0, 0)),  # Wn (fetched once)
        ],
        out_specs=pl.BlockSpec((bt, time * D), lambda i: (i, 0)),
        compiler_params=pltpu.CompilerParams(
            dimension_semantics=("parallel",),   # batch tiles independent -> megacore
            vmem_limit_bytes=_VMEM_LIMIT_BYTES,
        ),
    )(state, next_packed, w_state, w_next)

    # Free reshape back to the module's output layout.
    pred_state_traj = flat_pred.reshape(batch, time, D)
    return dict(pred_state_traj=pred_state_traj)


if __name__ == "__main__":
    # Small shapes consistent with the module's forward contract.
    batch = 2
    pred_horizon = 7
    state_dim = 32

    key = jax.random.PRNGKey(0)
    k_state, k_next, k_cob = jax.random.split(key, 3)

    state = jax.random.normal(k_state, (batch, state_dim), dtype=jnp.float32)
    next_state = jax.random.normal(
        k_next, (batch, pred_horizon, state_dim), dtype=jnp.float32
    )

    # Deterministic, well-conditioned change of basis (full rank by construction),
    # mirroring MarkovDynamics.__init__ which inverts it with linalg.inv.
    change_of_basis = (
        jnp.eye(state_dim, dtype=jnp.float32)
        + 0.1 * jax.random.normal(k_cob, (state_dim, state_dim), dtype=jnp.float32)
    )
    inv_change_of_basis = jnp.linalg.inv(change_of_basis).astype(jnp.float32)

    out = markov_dynamics_forward(
        state, next_state, change_of_basis, inv_change_of_basis
    )
    pred = jax.block_until_ready(out["pred_state_traj"])

    # Pure-JAX reference of the same forward pass (identity dynamics + basis round trip).
    traj = jnp.concatenate([state[:, None, :], next_state], axis=1)
    flat = traj.reshape(batch * (pred_horizon + 1), state_dim)
    ref = (flat @ change_of_basis.T) @ inv_change_of_basis.T
    ref = ref.reshape(batch, pred_horizon + 1, state_dim)

    assert pred.shape == (batch, pred_horizon + 1, state_dim), pred.shape
    assert jnp.allclose(pred, ref, atol=1e-4, rtol=1e-4), "mismatch vs reference"

    print("KERNEL_OK")
</pallas_src>

<mosaic_0001>
module attributes {stable_mosaic.version = 11 : i64} {
  func.func @_dynamics_kernel(%arg0: i32, %arg1: memref<2x32xf32, #tpu.memory_space<vmem>>, %arg2: memref<2x224xf32, #tpu.memory_space<vmem>>, %arg3: memref<32x256xf32, #tpu.memory_space<vmem>>, %arg4: memref<224x256xf32, #tpu.memory_space<vmem>>, %arg5: memref<2x256xf32, #tpu.memory_space<vmem>>) attributes {dimension_semantics = [#tpu.dimension_semantics<parallel>], iteration_bounds = array<i64: 1>, scalar_prefetch = 0 : i64, scratch_operands = 0 : i64, tpu.core_type = #tpu.core_type<tc>, window_params = [{transform_indices = @transform_0, window_bounds = array<i64: 2, 32>}, {transform_indices = @transform_1, window_bounds = array<i64: 2, 224>}, {pipeline_mode = #tpu.pipeline_mode<synchronous>, transform_indices = @transform_2, window_bounds = array<i64: 32, 256>}, {pipeline_mode = #tpu.pipeline_mode<synchronous>, transform_indices = @transform_3, window_bounds = array<i64: 224, 256>}, {transform_indices = @transform_4, window_bounds = array<i64: 2, 256>}]} {
    %c0 = arith.constant 0 : index
    %c0_0 = arith.constant 0 : index
    %0 = vector.load %arg1[%c0, %c0_0] : memref<2x32xf32, #tpu.memory_space<vmem>>, vector<2x32xf32>
    %c0_1 = arith.constant 0 : index
    %c0_2 = arith.constant 0 : index
    %1 = vector.load %arg3[%c0_1, %c0_2] : memref<32x256xf32, #tpu.memory_space<vmem>>, vector<32x256xf32>
    %cst = arith.constant dense<0.000000e+00> : vector<2x256xf32>
    %2 = tpu.matmul %0, %1, %cst {dimension_numbers = #tpu.dot_dimension_numbers<[1], [0], [0], [1], [0, 0, 1, 1], [], []>} : vector<2x32xf32>, vector<32x256xf32>, vector<2x256xf32> -> vector<2x256xf32>
    %c0_3 = arith.constant 0 : index
    %c0_4 = arith.constant 0 : index
    %3 = vector.load %arg2[%c0_3, %c0_4] : memref<2x224xf32, #tpu.memory_space<vmem>>, vector<2x224xf32>
    %c0_5 = arith.constant 0 : index
    %c0_6 = arith.constant 0 : index
    %4 = vector.load %arg4[%c0_5, %c0_6] : memref<224x256xf32, #tpu.memory_space<vmem>>, vector<224x256xf32>
    %cst_7 = arith.constant dense<0.000000e+00> : vector<2x256xf32>
    %5 = tpu.matmul %3, %4, %cst_7 {dimension_numbers = #tpu.dot_dimension_numbers<[1], [0], [0], [1], [0, 0, 1, 1], [], []>} : vector<2x224xf32>, vector<224x256xf32>, vector<2x256xf32> -> vector<2x256xf32>
    %6 = arith.addf %2, %5 : vector<2x256xf32>
    %c0_8 = arith.constant 0 : index
    %c0_9 = arith.constant 0 : index
    %7 = vector.load %arg5[%c0_8, %c0_9] : memref<2x256xf32, #tpu.memory_space<vmem>>, vector<2x256xf32>
    tpu.vector_store %arg5[%c0_8, %c0_9], %6 {strides = array<i32>} : memref<2x256xf32, #tpu.memory_space<vmem>>, vector<2x256xf32>,
    return
  }
  func.func @transform_0(%arg0: i32) -> (i32, i32) {
    %c0_i32 = arith.constant 0 : i32
    %c0_i32_0 = arith.constant 0 : i32
    return %arg0, %c0_i32 : i32, i32
  }
  func.func @transform_1(%arg0: i32) -> (i32, i32) {
    %c0_i32 = arith.constant 0 : i32
    %c0_i32_0 = arith.constant 0 : i32
    return %arg0, %c0_i32 : i32, i32
  }
  func.func @transform_2(%arg0: i32) -> (i32, i32) {
    %c0_i32 = arith.constant 0 : i32
    %c0_i32_0 = arith.constant 0 : i32
    %c0_i32_1 = arith.constant 0 : i32
    return %c0_i32, %c0_i32_0 : i32, i32
  }
  func.func @transform_3(%arg0: i32) -> (i32, i32) {
    %c0_i32 = arith.constant 0 : i32
    %c0_i32_0 = arith.constant 0 : i32
    %c0_i32_1 = arith.constant 0 : i32
    return %c0_i32, %c0_i32_0 : i32, i32
  }
  func.func @transform_4(%arg0: i32) -> (i32, i32) {
    %c0_i32 = arith.constant 0 : i32
    %c0_i32_0 = arith.constant 0 : i32
    return %arg0, %c0_i32 : i32, i32
  }
}

</mosaic_0001>

<llo_original>
// kernel: tpu_custom_call.1
$region0: #{tpu_custom_call.1}
  #allocation0 [shape = 'u32[]', space=smem, size = 0x4, offset = 0x4, fixed_abs, tag = 'smem constant byte address 0x4 - core index']
  #allocation1 [shape = 'u32[144,128]{1,0:T(1,128)}', space=vmem, size = 0x12000, scoped, tag = 'internal scratch']
  %s0 = inlined_call_operand.hbm [shape: f32[2,32], index: 0, kind: input, shape index: {}]
  %s1 = inlined_call_operand.hbm [shape: f32[2,224], index: 1, kind: input, shape index: {}]
  %s2 = inlined_call_operand.hbm [shape: f32[32,256], index: 2, kind: input, shape index: {}]
  %s3 = inlined_call_operand.hbm [shape: f32[224,256], index: 3, kind: input, shape index: {}]
  %s4 = inlined_call_operand.hbm [shape: f32[2,256], index: 4, kind: output, shape index: {}]
  %s5 = sld [smem:[#allocation0]]
  $region42: #{tpu_custom_call.1} parent=0
    _
  %s7 = ssub.s32 1, %s5
  %s8 = scalar_select 0, %s7, %s5
  $region1: #{tpu_custom_call.1} parent=0
    #allocation2 [shape = 'u8[1024]{0}', space=vmem, size = 0x400, scoped, tag = 'input window, operand 0, single buffered']
    #allocation3 [shape = 's32[1]{0}', space=sflag, size = 0x4, scoped, tag = 'scoped memory for tpu_custom_call.1']
    #allocation4 [shape = 's32[1]{0}', space=sflag, size = 0x4, scoped, tag = 'scoped memory for tpu_custom_call.1']
    #allocation5 [shape = 'u8[2048]{0}', space=vmem, size = 0x800, scoped, tag = 'input window, operand 1, single buffered']
    #allocation6 [shape = 's32[1]{0}', space=sflag, size = 0x4, scoped, tag = 'scoped memory for tpu_custom_call.1']
    #allocation7 [shape = 'u8[32768]{0}', space=vmem, size = 0x8000, scoped, tag = 'input window, operand 2, single buffered']
    #allocation8 [shape = 'u8[229376]{0}', space=vmem, size = 0x38000, scoped, tag = 'input window, operand 3, single buffered']
    #allocation9 [shape = 's32[1]{0}', space=sflag, size = 0x4, scoped, tag = 'scoped memory for tpu_custom_call.1']
    #allocation10 [shape = 'u8[2048]{0}', space=vmem, size = 0x800, scoped, tag = 'output window, operand 0, single buffered']
    %9 = vsyncpa [#allocation3], 0
    %10 = vsyncpa [#allocation6], 0
    %11 = vsyncpa [#allocation9], 0
    %12 = vsyncpa [#allocation4], 0
    // Predicated region
    $region2: #{tpu_custom_call.1} parent=1 // pred_check
      _
    $region3: #{tpu_custom_call.1} parent=1 // pred_check_branch
      %14 = sbr.rel (0) target = $region5
    $region4: #{tpu_custom_call.1} parent=1 // pred_region
      %s16 = ssub.s32 32, 32
      %17 = vsyncadd [#allocation3], %s16
      %s19 = sshll.u32 [#allocation2], 4
      %s20 = int_to_ptr.vmem [resolvable:$true] %s19
      %22 = dma.hbm_to_vmem [thread:$0]  %s0, 32, %s20, [#allocation3]
    $region5: #{tpu_custom_call.1} parent=1 // pred_fallthru
      _
    // Predicated region
    $region6: #{tpu_custom_call.1} parent=1 // pred_check
      _
    $region7: #{tpu_custom_call.1} parent=1 // pred_check_branch
      %24 = sbr.rel (0) target = $region9
    $region8: #{tpu_custom_call.1} parent=1 // pred_region
      %s26 = ssub.s32 64, 64
      %27 = vsyncadd [#allocation6], %s26
      %s29 = sshll.u32 [#allocation5], 4
      %s30 = int_to_ptr.vmem [resolvable:$true] %s29
      %32 = dma.hbm_to_vmem [thread:$0]  %s1, 64, %s30, [#allocation6]
    $region9: #{tpu_custom_call.1} parent=1 // pred_fallthru
      _
    // Predicated region
    $region10: #{tpu_custom_call.1} parent=1 // pred_check
      _
    $region11: #{tpu_custom_call.1} parent=1 // pred_check_branch
      %34 = sbr.rel (0) target = $region13
    $region12: #{tpu_custom_call.1} parent=1 // pred_region
      %s36 = ssub.s32 1024, 1024
      %37 = vsyncadd [#allocation6], %s36
      %s38 = sshll.u32 [#allocation7], 4
      %s39 = int_to_ptr.vmem [resolvable:$true] %s38
      %44 = dma.hbm_to_vmem [thread:$0]  %s2, 1024, %s39, [#allocation6], 256, 256, 16
    $region13: #{tpu_custom_call.1} parent=1 // pred_fallthru
      _
    // Predicated region
    $region14: #{tpu_custom_call.1} parent=1 // pred_check
      _
    $region15: #{tpu_custom_call.1} parent=1 // pred_check_branch
      %46 = sbr.rel (0) target = $region17
    $region16: #{tpu_custom_call.1} parent=1 // pred_region
      %s48 = ssub.s32 7168, 7168
      %49 = vsyncadd [#allocation9], %s48
      %s50 = sshll.u32 [#allocation8], 4
      %s51 = int_to_ptr.vmem [resolvable:$true] %s50
      %56 = dma.hbm_to_vmem [thread:$0]  %s3, 7168, %s51, [#allocation9], 256, 256, 16
    $region17: #{tpu_custom_call.1} parent=1 // pred_fallthru
      _
    // Predicated region
    $region18: #{tpu_custom_call.1} parent=1 // pred_check
      _
    $region19: #{tpu_custom_call.1} parent=1 // pred_check_branch
      %58 = sbr.rel (0) target = $region21
    $region20: #{tpu_custom_call.1} parent=1 // pred_region
      %59 = dma.done [#allocation3], 32
    $region21: #{tpu_custom_call.1} parent=1 // pred_fallthru
      _
    // Predicated region
    $region22: #{tpu_custom_call.1} parent=1 // pred_check
      _
    $region23: #{tpu_custom_call.1} parent=1 // pred_check_branch
      %61 = sbr.rel (0) target = $region25
    $region24: #{tpu_custom_call.1} parent=1 // pred_region
      %62 = dma.done [#allocation6], 64
    $region25: #{tpu_custom_call.1} parent=1 // pred_fallthru
      _
    // Predicated region
    $region26: #{tpu_custom_call.1} parent=1 // pred_check
      _
    $region27: #{tpu_custom_call.1} parent=1 // pred_check_branch
      %64 = sbr.rel (0) target = $region29
    $region28: #{tpu_custom_call.1} parent=1 // pred_region
      %65 = dma.done [#allocation6], 1024
    $region29: #{tpu_custom_call.1} parent=1 // pred_fallthru
      _
    // Predicated region
    $region30: #{tpu_custom_call.1} parent=1 // pred_check
      _
    $region31: #{tpu_custom_call.1} parent=1 // pred_check_branch
      %67 = sbr.rel (0) target = $region33
    $region32: #{tpu_custom_call.1} parent=1 // pred_region
      %68 = dma.done [#allocation9], 7168
    $region33: #{tpu_custom_call.1} parent=1 // pred_fallthru
      _
    %v69 = vld [vmem:[#allocation2] sm:$0x3]
    %v70 = vld [vmem:[#allocation7] sm:$0xff]
    %v71 = vld [vmem:[#allocation7 + $0x8] sm:$0xff]
    %v72 = vld [vmem:[#allocation7 + $0x10] sm:$0xff]
    %v73 = vld [vmem:[#allocation7 + $0x18] sm:$0xff]
    %v74 = vld [vmem:[#allocation7 + $0x20] sm:$0xff]
    %v75 = vld [vmem:[#allocation7 + $0x28] sm:$0xff]
    %v76 = vld [vmem:[#allocation7 + $0x30] sm:$0xff]
    %v77 = vld [vmem:[#allocation7 + $0x38] sm:$0xff]
    %v78 = vld [vmem:[#allocation5] sm:$0xf]
    %v79 = vld [vmem:[#allocation8] sm:$0xff]
    %v80 = vld [vmem:[#allocation8 + $0x8] sm:$0xff]
    %v81 = vld [vmem:[#allocation8 + $0x10] sm:$0xff]
    %v82 = vld [vmem:[#allocation8 + $0x18] sm:$0xff]
    %v83 = vld [vmem:[#allocation8 + $0x20] sm:$0xff]
    %v84 = vld [vmem:[#allocation8 + $0x28] sm:$0xff]
    %v85 = vld [vmem:[#allocation8 + $0x30] sm:$0xff]
    %v86 = vld [vmem:[#allocation8 + $0x38] sm:$0xff]
    %v87 = vld [vmem:[#allocation8 + $0x40] sm:$0xff]
    %v88 = vld [vmem:[#allocation8 + $0x48] sm:$0xff]
    %v89 = vld [vmem:[#allocation8 + $0x50] sm:$0xff]
    %v90 = vld [vmem:[#allocation8 + $0x58] sm:$0xff]
    %v91 = vld [vmem:[#allocation8 + $0x60] sm:$0xff]
    %v92 = vld [vmem:[#allocation8 + $0x68] sm:$0xff]
    %v93 = vld [vmem:[#allocation8 + $0x70] sm:$0xff]
    %v94 = vld [vmem:[#allocation8 + $0x78] sm:$0xff]
    %v95 = vld [vmem:[#allocation8 + $0x80] sm:$0xff]
    %v96 = vld [vmem:[#allocation8 + $0x88] sm:$0xff]
    %v97 = vld [vmem:[#allocation8 + $0x90] sm:$0xff]
    %v98 = vld [vmem:[#allocation8 + $0x98] sm:$0xff]
    %v99 = vld [vmem:[#allocation8 + $0xa0] sm:$0xff]
    %v100 = vld [vmem:[#allocation8 + $0xa8] sm:$0xff]
    %v101 = vld [vmem:[#allocation8 + $0xb0] sm:$0xff]
    %v102 = vld [vmem:[#allocation8 + $0xb8] sm:$0xff]
    %v103 = vld [vmem:[#allocation8 + $0xc0] sm:$0xff]
    %v104 = vld [vmem:[#allocation8 + $0xc8] sm:$0xff]
    %v105 = vld [vmem:[#allocation8 + $0xd0] sm:$0xff]
    %v106 = vld [vmem:[#allocation8 + $0xd8] sm:$0xff]
    %v107 = vld [vmem:[#allocation8 + $0xe0] sm:$0xff]
    %v108 = vld [vmem:[#allocation8 + $0xe8] sm:$0xff]
    %v109 = vld [vmem:[#allocation8 + $0xf0] sm:$0xff]
    %v110 = vld [vmem:[#allocation8 + $0xf8] sm:$0xff]
    %v111 = vld [vmem:[#allocation8 + $0x100] sm:$0xff]
    %v112 = vld [vmem:[#allocation8 + $0x108] sm:$0xff]
    %v113 = vld [vmem:[#allocation8 + $0x110] sm:$0xff]
    %v114 = vld [vmem:[#allocation8 + $0x118] sm:$0xff]
    %v115 = vld [vmem:[#allocation8 + $0x120] sm:$0xff]
    %v116 = vld [vmem:[#allocation8 + $0x128] sm:$0xff]
    %v117 = vld [vmem:[#allocation8 + $0x130] sm:$0xff]
    %v118 = vld [vmem:[#allocation8 + $0x138] sm:$0xff]
    %v119 = vld [vmem:[#allocation8 + $0x140] sm:$0xff]
    %v120 = vld [vmem:[#allocation8 + $0x148] sm:$0xff]
    %v121 = vld [vmem:[#allocation8 + $0x150] sm:$0xff]
    %v122 = vld [vmem:[#allocation8 + $0x158] sm:$0xff]
    %v123 = vld [vmem:[#allocation8 + $0x160] sm:$0xff]
    %v124 = vld [vmem:[#allocation8 + $0x168] sm:$0xff]
    %v125 = vld [vmem:[#allocation8 + $0x170] sm:$0xff]
    %v126 = vld [vmem:[#allocation8 + $0x178] sm:$0xff]
    %v127 = vld [vmem:[#allocation8 + $0x180] sm:$0xff]
    %v128 = vld [vmem:[#allocation8 + $0x188] sm:$0xff]
    %v129 = vld [vmem:[#allocation8 + $0x190] sm:$0xff]
    %v130 = vld [vmem:[#allocation8 + $0x198] sm:$0xff]
    %v131 = vld [vmem:[#allocation8 + $0x1a0] sm:$0xff]
    %v132 = vld [vmem:[#allocation8 + $0x1a8] sm:$0xff]
    %v133 = vld [vmem:[#allocation8 + $0x1b0] sm:$0xff]
    %v134 = vld [vmem:[#allocation8 + $0x1b8] sm:$0xff]
    %v137 = vunpack.c.l.s4 1983009808
    %v138 = vunpack.c.0.s8 %v137
    %v139 = vlaneseq
    %v140 = vshrl.u32 %v139, 7
    %v141 = vsub.s32 %v138, %v140
    %v142 = vrot.slane %v78, %v141
    %v143 = vcombine.high %v142, %v142
    %vm145 = vcmask 785408
    %v146 = vsel %vm145, %v143, 0
    %148 = vmatprep.subr.mxu0 %v80
    %149 = vmatpush1.msra.mxu0 %v79
    %150 = vmatprep.subr.mxu0 %v82
    %151 = vmatpush1.msra.mxu0 %v81
    %152 = vmatprep.subr.mxu0 %v84
    %153 = vmatpush1.msra.mxu0 %v83
    %154 = vmatprep.subr.mxu0 %v86
    %155 = vmatpush1.msra.mxu0 %v85
    %156 = vmatprep.subr.mxu0 %v88
    %157 = vmatpush1.msra.mxu0 %v87
    %158 = vmatprep.subr.mxu0 %v90
    %159 = vmatpush1.msra.mxu0 %v89
    %160 = vmatprep.subr.mxu0 %v92
    %161 = vmatpush1.msra.mxu0 %v91
    %162 = vmatprep.subr.mxu0 %v94
    %163 = vmatpush1.msra.mxu0 %v93
    %164 = vmatprep.subr.mxu0 %v96
    %165 = vmatpush1.msra.mxu0 %v95
    %166 = vmatprep.subr.mxu0 %v98
    %167 = vmatpush1.msra.mxu0 %v97
    %168 = vmatprep.subr.mxu0 %v100
    %169 = vmatpush1.msra.mxu0 %v99
    %170 = vmatprep.subr.mxu0 %v102
    %171 = vmatpush1.msra.mxu0 %v101
    %172 = vmatprep.subr.mxu0 %v104
    %173 = vmatpush1.msra.mxu0 %v103
    %174 = vmatprep.subr.mxu0 %v106
    %175 = vmatpush1.msra.mxu0 %v105
    %176 = vmatprep.subr.mxu0 %v108
    %177 = vmatpush1.msra.mxu0 %v107
    %178 = vmatprep.subr.mxu0 %v110
    %179 = vmatpush1.msra.mxu0 %v109
    %180 = vmatprep.subr.mxu0 %v112
    %181 = vmatpush1.msra.mxu0 %v111
    %182 = vmatprep.subr.mxu0 %v114
    %183 = vmatpush1.msra.mxu0 %v113
    %184 = vmatprep.subr.mxu0 %v116
    %185 = vmatpush1.msra.mxu0 %v115
    %186 = vmatprep.subr.mxu0 %v118
    %187 = vmatpush1.msra.mxu0 %v117
    %188 = vmatprep.subr.mxu0 %v120
    %189 = vmatpush1.msra.mxu0 %v119
    %190 = vmatprep.subr.mxu0 %v122
    %191 = vmatpush1.msra.mxu0 %v121
    %192 = vmatprep.subr.mxu0 %v124
    %193 = vmatpush1.msra.mxu0 %v123
    %194 = vmatprep.subr.mxu0 %v126
    %195 = vmatpush1.msra.mxu0 %v125
    %196 = vmatprep.subr.mxu0 %v128
    %197 = vmatpush1.msra.mxu0 %v127
    %198 = vmatprep.subr.mxu0 %v130
    %199 = vmatpush1.msra.mxu0 %v129
    %200 = vmatprep.subr.mxu0 %v132
    %201 = vmatpush1.msra.mxu0 %v131
    %202 = vmatprep.subr.mxu0 %v134
    %203 = vmatpush1.msra.mxu0 %v133
    %204 = vmatprep.subr.mxu0 0.0
    %205 = vmatpush1.msra.mxu0 0.0
    %206 = vmatprep.subr.mxu0 0.0
    %207 = vmatpush1.msra.mxu0 0.0
    %208 = vmatprep.subr.mxu0 0.0
    %209 = vmatpush1.msra.mxu0 0.0
    %210 = vmatprep.subr.mxu0 0.0
    %211 = vmatpush1.msra.mxu0 0.0
    %212 = vmatprep.mubr.f32.mxu0 %v146
    %213 = vmatmul.mubr.f32.gmra.mrb[0].mxu0 %v142
    %v214 = vpop.f32.mrb[0].mxu0
    %v215 = vadd.f32 0.0, %v214
    %v216 = vpop.f32.mrb[0].mxu0
    %v217 = vadd.f32 0.0, %v216
    %218 = vdwg.mxu0
    %vm219 = vcmask 261120
    %v221 = vsel %vm219, %v69, 0
    %223 = vmatprep.subr.mxu0 %v71
    %224 = vmatpush1.msra.mxu0 %v70
    %225 = vmatprep.subr.mxu0 %v73
    %226 = vmatpush1.msra.mxu0 %v72
    %227 = vmatprep.subr.mxu0 %v75
    %228 = vmatpush1.msra.mxu0 %v74
    %229 = vmatprep.subr.mxu0 %v77
    %230 = vmatpush1.msra.mxu0 %v76
    %231 = vmatprep.subr.mxu0 0.0
    %232 = vmatpush1.msra.mxu0 0.0
    %233 = vmatprep.subr.mxu0 0.0
    %234 = vmatpush1.msra.mxu0 0.0
    %235 = vmatprep.subr.mxu0 0.0
    %236 = vmatpush1.msra.mxu0 0.0
    %237 = vmatprep.subr.mxu0 0.0
    %238 = vmatpush1.msra.mxu0 0.0
    %239 = vmatprep.subr.mxu0 0.0
    %240 = vmatpush1.msra.mxu0 0.0
    %241 = vmatprep.subr.mxu0 0.0
    %242 = vmatpush1.msra.mxu0 0.0
    %243 = vmatprep.subr.mxu0 0.0
    %244 = vmatpush1.msra.mxu0 0.0
    %245 = vmatprep.subr.mxu0 0.0
    %246 = vmatpush1.msra.mxu0 0.0
    %247 = vmatprep.subr.mxu0 0.0
    %248 = vmatpush1.msra.mxu0 0.0
    %249 = vmatprep.subr.mxu0 0.0
    %250 = vmatpush1.msra.mxu0 0.0
    %251 = vmatprep.subr.mxu0 0.0
    %252 = vmatpush1.msra.mxu0 0.0
    %253 = vmatprep.subr.mxu0 0.0
    %254 = vmatpush1.msra.mxu0 0.0
    %255 = vmatprep.subr.mxu0 0.0
    %256 = vmatpush1.msra.mxu0 0.0
    %257 = vmatprep.subr.mxu0 0.0
    %258 = vmatpush1.msra.mxu0 0.0
    %259 = vmatprep.subr.mxu0 0.0
    %260 = vmatpush1.msra.mxu0 0.0
    %261 = vmatprep.subr.mxu0 0.0
    %262 = vmatpush1.msra.mxu0 0.0
    %263 = vmatprep.subr.mxu0 0.0
    %264 = vmatpush1.msra.mxu0 0.0
    %265 = vmatprep.subr.mxu0 0.0
    %266 = vmatpush1.msra.mxu0 0.0
    %267 = vmatprep.subr.mxu0 0.0
    %268 = vmatpush1.msra.mxu0 0.0
    %269 = vmatprep.subr.mxu0 0.0
    %270 = vmatpush1.msra.mxu0 0.0
    %271 = vmatprep.subr.mxu0 0.0
    %272 = vmatpush1.msra.mxu0 0.0
    %273 = vmatprep.subr.mxu0 0.0
    %274 = vmatpush1.msra.mxu0 0.0
    %275 = vmatprep.subr.mxu0 0.0
    %276 = vmatpush1.msra.mxu0 0.0
    %277 = vmatprep.subr.mxu0 0.0
    %278 = vmatpush1.msra.mxu0 0.0
    %279 = vmatprep.subr.mxu0 0.0
    %280 = vmatpush1.msra.mxu0 0.0
    %281 = vmatprep.subr.mxu0 0.0
    %282 = vmatpush1.msra.mxu0 0.0
    %283 = vmatprep.subr.mxu0 0.0
    %284 = vmatpush1.msra.mxu0 0.0
    %285 = vmatprep.subr.mxu0 0.0
    %286 = vmatpush1.msra.mxu0 0.0
    %287 = vmatprep.mubr.f32.mxu0 0.0
    %288 = vmatmul.mubr.f32.gmra.mrb[0].mxu0 %v221
    %v289 = vpop.f32.mrb[0].mxu0
    %v290 = vadd.f32 %v215, %v289
    %v291 = vpop.f32.mrb[0].mxu0
    %v292 = vadd.f32 %v217, %v291
    %293 = vdwg.mxu0
    %v296 = vcombine.low %v290, %v292
    %v298 = vunpack.c.l.s4 1983009808
    %v299 = vunpack.c.0.s8 %v298
    %v300 = vlaneseq
    %v301 = vshrl.u32 %v300, 7
    %v302 = vsub.s32 %v299, %v301
    %v303 = vrot.slane %v296, %v302
    %305 = vst [vmem:[#allocation10] sm:$0xf] %v303
    // Predicated region
    $region34: #{tpu_custom_call.1} parent=1 // pred_check
      _
    $region35: #{tpu_custom_call.1} parent=1 // pred_check_branch
      %307 = sbr.rel (0) target = $region37
    $region36: #{tpu_custom_call.1} parent=1 // pred_region
      %s309 = ssub.s32 64, 64
      %310 = vsyncadd [#allocation4], %s309
      %s312 = sshll.u32 [#allocation10], 4
      %s313 = int_to_ptr.vmem [resolvable:$true] %s312
      %315 = dma.vmem_to_hbm [thread:$0]  %s313, 64, %s4, [#allocation4]
    $region37: #{tpu_custom_call.1} parent=1 // pred_fallthru
      _
    // Predicated region
    $region38: #{tpu_custom_call.1} parent=1 // pred_check
      _
    $region39: #{tpu_custom_call.1} parent=1 // pred_check_branch
      %317 = sbr.rel (0) target = $region41
    $region40: #{tpu_custom_call.1} parent=1 // pred_region
      %318 = dma.done [#allocation4], 64
    $region41: #{tpu_custom_call.1} parent=1 // pred_fallthru
      _
    %319 = vsyncpa [#allocation3], 1
    %320 = vsyncpa [#allocation6], 1
    %321 = vsyncpa [#allocation9], 1
    %322 = vsyncpa [#allocation4], 1

</llo_original>
